<compile_context>
chip_gen: v5e
topology: v5e:2x2
jax: 0.10.0
libtpu: 0.0.40
codegen_flags: <defaults>
</compile_context>

<pallas_src>
import functools

import jax
import jax.numpy as jnp
from jax.experimental import pallas as pl
from jax.experimental.pallas import tpu as pltpu


def _round_up(x, m):
    return ((x + m - 1) // m) * m


# -----------------------------------------------------------------------------
# Kernel body
# -----------------------------------------------------------------------------
def spectral_critic_kernel(x_ref, w_ref, b_ref, o_ref):
    # x_ref: (block_b, in_size), w_ref: (in_size, block_n), b_ref: (1, block_n)
    x = x_ref[...]
    if x.dtype != w_ref.dtype:
        # In-kernel cast (f32 HBM -> bf16 vregs): halves activation HBM traffic
        # vs. a wrapper-side astype (extra full read+write pass over x).
        x = x.astype(w_ref.dtype)
    # MXU matmul with f32 accumulation.
    # TODO(synk): if a true-f32 path is ever needed at large in_size, pass
    # precision=jax.lax.Precision.HIGHEST here (3-pass MXU, ~3-6x cost);
    # default single-pass rounding is fine at the tested K=32.
    y = jnp.dot(x, w_ref[...], preferred_element_type=jnp.float32)
    y = y + b_ref[...]  # bias row broadcasts over the batch tile
    # LeakyReLU(0.2): for 0 < slope < 1, max(y, 0.2*y) == where(y>=0, y, 0.2*y),
    # lowering to mul+max (one fewer VALU slot per vreg than cmp+mul+select).
    o_ref[...] = jnp.maximum(y, 0.2 * y).astype(o_ref.dtype)


# -----------------------------------------------------------------------------
# Init-time parameter prep (runs once, NOT on the per-call path)
# -----------------------------------------------------------------------------
def prepare_params(w_t, b, *, use_bf16=True):
    """Pad out_features to a 128-multiple (lane-dense, unmasked stores) and
    pre-cast the weight to bf16.  Doing this once at init removes the per-call
    pad/cast HBM traffic and two XLA dispatches from every forward pass."""
    in_size, out_size = w_t.shape
    n_pad = _round_up(out_size, 128)
    b = jnp.reshape(b, (1, out_size))
    if n_pad != out_size:
        w_t = jnp.pad(w_t, ((0, 0), (0, n_pad - out_size)))
        b = jnp.pad(b, ((0, 0), (0, n_pad - out_size)))
    if use_bf16:
        w_t = w_t.astype(jnp.bfloat16)
    return w_t, b.astype(jnp.float32)


# -----------------------------------------------------------------------------
# Tile selection: biggest tiles that fit the VMEM budget (v7x: 64 MiB/TC)
# -----------------------------------------------------------------------------
def _footprint_bytes(bb, bn, in_size, x_itemsize, w_itemsize):
    # double-buffered x / W / bias / output tiles + f32 epilogue temps
    dbl = 2 * (bb * in_size * x_itemsize + in_size * bn * w_itemsize
               + bn * 4 + bb * bn * 4)
    return dbl + 2 * bb * bn * 4


def _choose_tiles(B, in_size, n_pad, x_itemsize, w_itemsize, budget_bytes):
    block_b = min(_round_up(B, 16), 256)
    block_n = min(512, n_pad)  # 256-512-wide N feeds the v6e/v7x 2x256 MXU
    while _footprint_bytes(block_b, block_n, in_size, x_itemsize, w_itemsize) > budget_bytes:
        if block_n > 128:
            block_n //= 2       # keep N >= 128 (lane-dense)
        elif block_b > 16:
            block_b //= 2       # then shrink the batch tile
        else:
            break
    return block_b, block_n


# -----------------------------------------------------------------------------
# Wrapper
# -----------------------------------------------------------------------------
@functools.partial(
    jax.jit, static_argnames=("out_size", "return_padded", "block_b", "block_n"))
def spectral_critic_block(x, w_t, b, *, out_size=None, return_padded=False,
                          block_b=None, block_n=None):
    """LeakyReLU(0.2)(x @ W^T + b).

    x:   (B, in_size)       activations (f32 or bf16; cast happens in-kernel)
    w_t: (in_size, n_pad)   weight from prepare_params (pre-padded, pre-cast)
    b:   (1, n_pad)         bias from prepare_params (f32, pre-padded)
    out_size: logical output width (defaults to n_pad = w_t.shape[1])
    """
    B, in_size = x.shape
    n_pad = w_t.shape[1]
    if out_size is None:
        out_size = n_pad
    out_dtype = x.dtype

    # Target <= 32 MiB of double-buffered tiles (half of v7x's 64 MiB/TC VMEM).
    budget = 32 * 1024 * 1024
    bb, bn = _choose_tiles(B, in_size, n_pad, x.dtype.itemsize, w_t.dtype.itemsize, budget)
    if block_b is not None:
        bb = min(_round_up(block_b, 16), _round_up(B, 16))
    if block_n is not None:
        bn = min(_round_up(block_n, 128), n_pad)
    fp = _footprint_bytes(bb, bn, in_size, x.dtype.itemsize, w_t.dtype.itemsize)
    # Derived VMEM limit (documents the real budget, catches oversized tiles),
    # with a floor for compiler-internal scratch and a v7x 64 MiB/TC ceiling.
    vmem_limit = int(min(max(2 * fp + (2 << 20), 16 << 20), 64 << 20))

    b_tiles = pl.cdiv(B, bb)
    n_tiles = pl.cdiv(n_pad, bn)

    # Put the larger operand on the OUTER grid axis so it streams from HBM
    # exactly once; the smaller operand is the one that gets re-fetched.
    weight_bytes = in_size * n_pad * w_t.dtype.itemsize
    act_bytes = B * in_size * x.dtype.itemsize
    if weight_bytes >= act_bytes:
        grid = (n_tiles, b_tiles)
        x_spec = pl.BlockSpec((bb, in_size), lambda n, i: (i, 0))
        w_spec = pl.BlockSpec((in_size, bn), lambda n, i: (0, n))
        bias_spec = pl.BlockSpec((1, bn), lambda n, i: (0, n))
        out_spec = pl.BlockSpec((bb, bn), lambda n, i: (i, n))
    else:
        grid = (b_tiles, n_tiles)
        x_spec = pl.BlockSpec((bb, in_size), lambda i, n: (i, 0))
        w_spec = pl.BlockSpec((in_size, bn), lambda i, n: (0, n))
        bias_spec = pl.BlockSpec((1, bn), lambda i, n: (0, n))
        out_spec = pl.BlockSpec((bb, bn), lambda i, n: (i, n))

    out = pl.pallas_call(
        spectral_critic_kernel,
        out_shape=jax.ShapeDtypeStruct((B, n_pad), out_dtype),
        grid_spec=pltpu.PrefetchScalarGridSpec(
            num_scalar_prefetch=0,
            grid=grid,
            in_specs=[x_spec, w_spec, bias_spec],
            out_specs=out_spec,
        ),
        compiler_params=pltpu.CompilerParams(
            # Both grid axes are independent -> megacore sharding on v7x.
            dimension_semantics=("parallel", "parallel"),
            vmem_limit_bytes=vmem_limit,
        ),
    )(x, w_t, b)

    if return_padded or out_size == n_pad:
        return out
    # NOTE: this slice is an extra (B, n_pad) read+write pass; latency-critical
    # consumers should pass return_padded=True and slice where it fuses.
    return out[:, :out_size]


# -----------------------------------------------------------------------------
# Init + reference + test
# -----------------------------------------------------------------------------
def init_linear_params(key, in_size, out_size, dtype=jnp.float32):
    """Deterministic init matching nn.Linear default (uniform +/- 1/sqrt(in))."""
    kw, kb = jax.random.split(key)
    bound = 1.0 / jnp.sqrt(jnp.asarray(in_size, dtype))
    # PyTorch stores weight as (out, in); we keep the transposed (in, out) layout.
    w_t = jax.random.uniform(kw, (in_size, out_size), dtype, -bound, bound)
    b = jax.random.uniform(kb, (1, out_size), dtype, -bound, bound)
    return w_t, b


def _leaky_linear_ref(x, w_t, b):
    y = x @ w_t + b
    return jnp.where(y >= 0, y, 0.2 * y)


if __name__ == "__main__":
    key = jax.random.PRNGKey(0)
    k_x, k_p = jax.random.split(key)

    batch, in_size, out_size = 16, 32, 16
    x = jax.random.normal(k_x, (batch, in_size), jnp.float32)
    w_t, b = init_linear_params(k_p, in_size, out_size)

    # --- f32 MXU path: tight check against the plain-JAX reference ----------
    w_f32, b_f32 = prepare_params(w_t, b, use_bf16=False)
    out_f32 = spectral_critic_block(x, w_f32, b_f32, out_size=out_size)
    jax.block_until_ready(out_f32)
    ref_f32 = _leaky_linear_ref(x, w_t, b)
    assert out_f32.shape == (batch, out_size)
    assert jnp.allclose(out_f32, ref_f32, atol=1e-5, rtol=1e-5)

    # --- bf16 MXU path (default): weight pre-cast at init, x cast in-kernel --
    w_bf16, b_bf16 = prepare_params(w_t, b, use_bf16=True)
    out_bf16 = spectral_critic_block(x, w_bf16, b_bf16, out_size=out_size)
    jax.block_until_ready(out_bf16)
    ref_bf16 = _leaky_linear_ref(
        x.astype(jnp.bfloat16).astype(jnp.float32),
        w_t.astype(jnp.bfloat16).astype(jnp.float32),
        b,
    )
    assert out_bf16.shape == (batch, out_size)
    assert jnp.allclose(out_bf16, ref_bf16, atol=1e-4, rtol=1e-4)

    print("KERNEL_OK")
</pallas_src>

<mosaic_0001>
module attributes {stable_mosaic.version = 11 : i64} {
  func.func @spectral_critic_kernel(%arg0: i32, %arg1: i32, %arg2: memref<16x32xf32, #tpu.memory_space<vmem>>, %arg3: memref<32x128xf32, #tpu.memory_space<vmem>>, %arg4: memref<1x128xf32, #tpu.memory_space<vmem>>, %arg5: memref<16x128xf32, #tpu.memory_space<vmem>>) attributes {dimension_semantics = [#tpu.dimension_semantics<parallel>, #tpu.dimension_semantics<parallel>], iteration_bounds = array<i64: 1, 1>, scalar_prefetch = 0 : i64, scratch_operands = 0 : i64, tpu.core_type = #tpu.core_type<tc>, window_params = [{transform_indices = @transform_0, window_bounds = array<i64: 16, 32>}, {transform_indices = @transform_1, window_bounds = array<i64: 32, 128>}, {transform_indices = @transform_2, window_bounds = array<i64: 1, 128>}, {transform_indices = @transform_3, window_bounds = array<i64: 16, 128>}]} {
    %c0 = arith.constant 0 : index
    %c0_0 = arith.constant 0 : index
    %0 = vector.load %arg2[%c0, %c0_0] : memref<16x32xf32, #tpu.memory_space<vmem>>, vector<16x32xf32>
    %c0_1 = arith.constant 0 : index
    %c0_2 = arith.constant 0 : index
    %1 = vector.load %arg3[%c0_1, %c0_2] : memref<32x128xf32, #tpu.memory_space<vmem>>, vector<32x128xf32>
    %cst = arith.constant dense<0.000000e+00> : vector<16x128xf32>
    %2 = tpu.matmul %0, %1, %cst {dimension_numbers = #tpu.dot_dimension_numbers<[1], [0], [0], [1], [0, 0, 1, 1], [], []>} : vector<16x32xf32>, vector<32x128xf32>, vector<16x128xf32> -> vector<16x128xf32>
    %c0_3 = arith.constant 0 : index
    %c0_4 = arith.constant 0 : index
    %3 = vector.load %arg4[%c0_3, %c0_4] : memref<1x128xf32, #tpu.memory_space<vmem>>, vector<1x128xf32>
    %4 = vector.broadcast %3 : vector<1x128xf32> to vector<16x128xf32>
    %5 = arith.addf %2, %4 : vector<16x128xf32>
    %cst_5 = arith.constant 2.000000e-01 : f32
    %6 = vector.broadcast %cst_5 : f32 to vector<16x128xf32>
    %7 = arith.mulf %6, %5 : vector<16x128xf32>
    %8 = arith.maximumf %5, %7 : vector<16x128xf32>
    %c0_6 = arith.constant 0 : index
    %c0_7 = arith.constant 0 : index
    %9 = vector.load %arg5[%c0_6, %c0_7] : memref<16x128xf32, #tpu.memory_space<vmem>>, vector<16x128xf32>
    tpu.vector_store %arg5[%c0_6, %c0_7], %8 {strides = array<i32>} : memref<16x128xf32, #tpu.memory_space<vmem>>, vector<16x128xf32>,
    return
  }
  func.func @transform_0(%arg0: i32, %arg1: i32) -> (i32, i32) {
    %c0_i32 = arith.constant 0 : i32
    %c0_i32_0 = arith.constant 0 : i32
    return %arg1, %c0_i32 : i32, i32
  }
  func.func @transform_1(%arg0: i32, %arg1: i32) -> (i32, i32) {
    %c0_i32 = arith.constant 0 : i32
    %c0_i32_0 = arith.constant 0 : i32
    return %c0_i32, %arg0 : i32, i32
  }
  func.func @transform_2(%arg0: i32, %arg1: i32) -> (i32, i32) {
    %c0_i32 = arith.constant 0 : i32
    %c0_i32_0 = arith.constant 0 : i32
    return %c0_i32, %arg0 : i32, i32
  }
  func.func @transform_3(%arg0: i32, %arg1: i32) -> (i32, i32) {
    %c0_i32 = arith.constant 0 : i32
    return %arg1, %arg0 : i32, i32
  }
}

</mosaic_0001>

<llo_original>
// kernel: spectral_critic_block.1
$region0: #{spectral_critic_block.1}
  #allocation0 [shape = 'u32[]', space=smem, size = 0x4, offset = 0x4, fixed_abs, tag = 'smem constant byte address 0x4 - core index']
  #allocation1 [shape = 'u32[72,128]{1,0:T(1,128)}', space=vmem, size = 0x9000, scoped, tag = 'internal scratch']
  %s0 = inlined_call_operand.hbm [shape: f32[16,32], index: 0, kind: input, shape index: {}]
  %s1 = inlined_call_operand.hbm [shape: f32[32,128], index: 1, kind: input, shape index: {}]
  %s2 = inlined_call_operand.vmem [shape: f32[1,128], index: 2, kind: input, shape index: {}]
  %s3 = inlined_call_operand.hbm [shape: f32[16,128], index: 3, kind: output, shape index: {}]
  %s4 = sld [smem:[#allocation0]]
  $region30: #{spectral_critic_block.1} parent=0
    _
  %s6 = ssub.s32 1, %s4
  %s7 = scalar_select 0, %s6, %s4
  $region1: #{spectral_critic_block.1} parent=0
    #allocation2 [shape = 'u8[8192]{0}', space=vmem, size = 0x2000, scoped, tag = 'input window, operand 0, single buffered']
    #allocation3 [shape = 's32[1]{0}', space=sflag, size = 0x4, scoped, tag = 'scoped memory for spectral_critic_block.1']
    #allocation4 [shape = 's32[1]{0}', space=sflag, size = 0x4, scoped, tag = 'scoped memory for spectral_critic_block.1']
    #allocation5 [shape = 'u8[16384]{0}', space=vmem, size = 0x4000, scoped, tag = 'input window, operand 1, single buffered']
    #allocation6 [shape = 's32[1]{0}', space=sflag, size = 0x4, scoped, tag = 'scoped memory for spectral_critic_block.1']
    #allocation7 [shape = 'u8[8192]{0}', space=vmem, size = 0x2000, scoped, tag = 'output window, operand 0, single buffered']
    %8 = vsyncpa [#allocation3], 0
    %9 = vsyncpa [#allocation6], 0
    %10 = vsyncpa [#allocation4], 0
    // Predicated region
    $region2: #{spectral_critic_block.1} parent=1 // pred_check
      _
    $region3: #{spectral_critic_block.1} parent=1 // pred_check_branch
      %12 = sbr.rel (0) target = $region5
    $region4: #{spectral_critic_block.1} parent=1 // pred_region
      %14 = vsyncadd [#allocation3], 0
      %s15 = sshll.u32 %s0, 4
      %s16 = int_to_ptr.hbm [resolvable:$true] %s15
      %s17 = sshll.u32 [#allocation2], 4
      %s18 = int_to_ptr.vmem [resolvable:$true] %s17
      %23 = dma.hbm_to_vmem [thread:$0]  %s16, 256, %s18, [#allocation3], 128, 128, 8
    $region5: #{spectral_critic_block.1} parent=1 // pred_fallthru
      _
    // Predicated region
    $region6: #{spectral_critic_block.1} parent=1 // pred_check
      _
    $region7: #{spectral_critic_block.1} parent=1 // pred_check_branch
      %25 = sbr.rel (0) target = $region9
    $region8: #{spectral_critic_block.1} parent=1 // pred_region
      %27 = vsyncadd [#allocation6], 0
      %s28 = sshll.u32 %s1, 4
      %s29 = int_to_ptr.hbm [resolvable:$true] %s28
      %s30 = sshll.u32 [#allocation5], 4
      %s31 = int_to_ptr.vmem [resolvable:$true] %s30
      %36 = dma.hbm_to_vmem [thread:$0]  %s29, 512, %s31, [#allocation6], 128, 128, 8
    $region9: #{spectral_critic_block.1} parent=1 // pred_fallthru
      _
    // Predicated region
    $region10: #{spectral_critic_block.1} parent=1 // pred_check
      _
    $region11: #{spectral_critic_block.1} parent=1 // pred_check_branch
      %38 = sbr.rel (0) target = $region13
    $region12: #{spectral_critic_block.1} parent=1 // pred_region
      _
    $region13: #{spectral_critic_block.1} parent=1 // pred_fallthru
      _
    // Predicated region
    $region14: #{spectral_critic_block.1} parent=1 // pred_check
      _
    $region15: #{spectral_critic_block.1} parent=1 // pred_check_branch
      %40 = sbr.rel (0) target = $region17
    $region16: #{spectral_critic_block.1} parent=1 // pred_region
      %42 = dma.done [#allocation3], 256
    $region17: #{spectral_critic_block.1} parent=1 // pred_fallthru
      _
    // Predicated region
    $region18: #{spectral_critic_block.1} parent=1 // pred_check
      _
    $region19: #{spectral_critic_block.1} parent=1 // pred_check_branch
      %44 = sbr.rel (0) target = $region21
    $region20: #{spectral_critic_block.1} parent=1 // pred_region
      %46 = dma.done [#allocation6], 512
    $region21: #{spectral_critic_block.1} parent=1 // pred_fallthru
      _
    %v47 = vld [vmem:[#allocation2] sm:$0xff]
    %v48 = vld [vmem:[#allocation2 + $0x8] sm:$0xff]
    %v49 = vld [vmem:[#allocation5] sm:$0xff]
    %v50 = vld [vmem:[#allocation5 + $0x8] sm:$0xff]
    %v51 = vld [vmem:[#allocation5 + $0x10] sm:$0xff]
    %v52 = vld [vmem:[#allocation5 + $0x18] sm:$0xff]
    %v53 = vld [vmem:[%s2] sm:$0x1]
    %v55 = vperm.slane %v53, 0
    %vm57 = vcmask 261120
    %v59 = vsel %vm57, %v47, 0
    %v62 = vsel %vm57, %v48, 0
    %64 = vmatpush.msra.mxu0 0.0
    %65 = vmatpush.msra.mxu0 0.0
    %66 = vmatpush.msra.mxu0 0.0
    %67 = vmatpush.msra.mxu0 0.0
    %68 = vmatpush.msra.mxu0 0.0
    %69 = vmatpush.msra.mxu0 0.0
    %70 = vmatpush.msra.mxu0 0.0
    %71 = vmatpush.msra.mxu0 0.0
    %72 = vmatpush.msra.mxu0 0.0
    %73 = vmatpush.msra.mxu0 0.0
    %74 = vmatpush.msra.mxu0 0.0
    %75 = vmatpush.msra.mxu0 0.0
    %76 = vmatpush.msra.mxu0 %v52
    %77 = vmatpush.msra.mxu0 %v51
    %78 = vmatpush.msra.mxu0 %v50
    %79 = vmatpush.msra.mxu0 %v49
    %80 = vmatmul.f32.gmra.mxu0 %v59
    %v81 = vpop.f32.mrf.mxu0
    %v82 = vadd.f32 %v55, %v81
    %83 = vmatmul.f32.gmra.mxu0 %v62
    %v84 = vpop.f32.mrf.mxu0
    %v85 = vadd.f32 %v55, %v84
    %86 = vdwg.mxu0
    %v87 = vmul.f32 %v82, 0.2
    %v88 = vmul.f32 %v85, 0.2
    %v89 = vmax.f32 %v82, %v87
    %v90 = vmax.f32 %v85, %v88
    %91 = vst [vmem:[#allocation7] sm:$0xff] %v89
    %92 = vst [vmem:[#allocation7 + $0x8] sm:$0xff] %v90
    // Predicated region
    $region22: #{spectral_critic_block.1} parent=1 // pred_check
      _
    $region23: #{spectral_critic_block.1} parent=1 // pred_check_branch
      %94 = sbr.rel (0) target = $region25
    $region24: #{spectral_critic_block.1} parent=1 // pred_region
      %96 = vsyncadd [#allocation4], 0
      %s97 = sshll.u32 [#allocation7], 4
      %s98 = int_to_ptr.vmem [resolvable:$true] %s97
      %s99 = sshll.u32 %s3, 4
      %s100 = int_to_ptr.hbm [resolvable:$true] %s99
      %105 = dma.vmem_to_hbm [thread:$0]  %s98, 256, %s100, [#allocation4], 128, 128, 8
    $region25: #{spectral_critic_block.1} parent=1 // pred_fallthru
      _
    // Predicated region
    $region26: #{spectral_critic_block.1} parent=1 // pred_check
      _
    $region27: #{spectral_critic_block.1} parent=1 // pred_check_branch
      %107 = sbr.rel (0) target = $region29
    $region28: #{spectral_critic_block.1} parent=1 // pred_region
      %109 = dma.done [#allocation4], 256
    $region29: #{spectral_critic_block.1} parent=1 // pred_fallthru
      _
    %110 = vsyncpa [#allocation3], 1
    %111 = vsyncpa [#allocation6], 1
    %112 = vsyncpa [#allocation4], 1

</llo_original>
